<compile_context>
chip_gen: v6e
topology: v6e:2x2x1
jax: 0.10.0
libtpu: 0.0.40
codegen_flags: <defaults>
</compile_context>

<pallas_src>
import functools

import jax
import jax.numpy as jnp
from jax.experimental import pallas as pl
from jax.experimental.pallas import tpu as pltpu


def _outconv2_kernel(x_ref, w_ref, b_ref, o_ref, *, sig, c_in, c_out):
    """Fused (1x1 conv -> 1x1 conv -> act) on one (C_in, TR, 128) pixel slab.

    x_ref : (C_in, TR, 128)  VMEM   dense (sublane, lane) pixel tiles
    w_ref : (C_out, C_in)    SMEM   fused weight  W_eff = w2 @ w1
    b_ref : (C_out,)         SMEM   fused bias    b_eff = w2 @ b1 + b2
    o_ref : (C_out, TR, 128) VMEM
    """
    # Load each input-channel slab exactly once (static unroll; tiny counts).
    xs = [x_ref[ci] for ci in range(c_in)]
    for co in range(c_out):
        acc = xs[0] * w_ref[co, 0]            # SMEM scalar * VPU vector (f32 acc)
        for ci in range(1, c_in):
            acc = acc + xs[ci] * w_ref[co, ci]
        acc = acc + b_ref[co]
        y = jax.nn.sigmoid(acc) if sig else jnp.tanh(acc)
        o_ref[co] = y.astype(o_ref.dtype)     # direct dense (TR, 128) store


def outconv2_pallas(x_nchw, w1, b1, w2, b2, *, sig=True, max_tile_rows=1024):
    """Forward pass of Outconv2.

    x_nchw : (N, C_in, H, W)
    w1     : (C_mid, C_in)   -- nn.Conv2d(in_ch, in_ch//2, 1) weight, squeezed
    b1     : (C_mid,)
    w2     : (C_out, C_mid)  -- nn.Conv2d(in_ch//2, out_ch, 1) weight, squeezed
    b2     : (C_out,)
    returns: (N, C_out, H, W), same dtype as x
    """
    N, C_in, H, W = x_nchw.shape
    C_mid, C_in_w = w1.shape
    C_out = w2.shape[0]
    assert C_in_w == C_in and w2.shape[1] == C_mid

    dtype = x_nchw.dtype
    itemsize = jnp.dtype(dtype).itemsize

    w1 = jnp.asarray(w1, jnp.float32)
    b1 = jnp.asarray(b1, jnp.float32)
    w2 = jnp.asarray(w2, jnp.float32)
    b2 = jnp.asarray(b2, jnp.float32)

    # Exact algebraic fusion of the two 1x1 convs (no nonlinearity in between).
    w_eff = w2 @ w1          # (C_out, C_in)
    b_eff = w2 @ b1 + b2     # (C_out,)

    # Lane/sublane-dense pixel layout: NCHW -> (N, C_in, rows, 128).
    P = H * W
    rows = -(-P // 128)                       # ceil(P / 128)
    P_pad = rows * 128

    x_flat = x_nchw.reshape(N, C_in, P)
    if P_pad != P:
        # Only the final <128-pixel sliver is padded (common UNet planes are
        # already multiples of 128, so this is usually a no-op pure reshape).
        x_flat = jnp.pad(x_flat, ((0, 0), (0, 0), (0, P_pad - P)))
    x_tiles = x_flat.reshape(N, C_in, rows, 128)

    # Row-tile size: whole plane per step when it fits; otherwise the largest
    # multiple-of-8 tile keeping double-buffered in+out under ~8 MiB VMEM
    # (comfortable on v5e 16 MiB / v7x 32 MiB scoped defaults).
    bytes_per_row = (C_in + C_out) * 128 * max(int(itemsize), 4)
    vmem_budget = 8 * 1024 * 1024
    cap = max(8, min(max_tile_rows, vmem_budget // (2 * bytes_per_row)))
    if rows <= cap:
        tp_rows = rows
    else:
        tp_rows = max(8, (cap // 8) * 8)

    # Keep >=2 grid steps so v7x's two TensorCores both get work.
    n_tiles = -(-rows // tp_rows)
    if N * n_tiles < 2 and rows >= 16:
        tp_rows = max(8, ((rows // 2) // 8) * 8)
        n_tiles = -(-rows // tp_rows)

    grid = (N, n_tiles)

    cost = pl.CostEstimate(
        flops=2 * N * P * C_in * C_out,
        transcendentals=N * P * C_out,
        bytes_accessed=N * (C_in + C_out) * P_pad * int(itemsize),
    )

    out_tiles = pl.pallas_call(
        functools.partial(_outconv2_kernel, sig=sig, c_in=C_in, c_out=C_out),
        out_shape=jax.ShapeDtypeStruct((N, C_out, rows, 128), dtype),
        grid_spec=pltpu.PrefetchScalarGridSpec(
            num_scalar_prefetch=0,
            grid=grid,
            in_specs=[
                # batch squeezed; (rows, 128) dense pixel tiles.
                pl.BlockSpec((None, C_in, tp_rows, 128),
                             lambda n, r: (n, 0, r, 0)),
                # tiny fused weight / bias live in SMEM (scalar reads)
                pl.BlockSpec(memory_space=pltpu.MemorySpace.SMEM),
                pl.BlockSpec(memory_space=pltpu.MemorySpace.SMEM),
            ],
            out_specs=pl.BlockSpec((None, C_out, tp_rows, 128),
                                   lambda n, r: (n, 0, r, 0)),
        ),
        compiler_params=pltpu.CompilerParams(
            dimension_semantics=("parallel", "parallel"),
        ),
        cost_estimate=cost,
    )(x_tiles, w_eff, b_eff)

    out = out_tiles.reshape(N, C_out, P_pad)
    if P_pad != P:
        out = out[:, :, :P]
    return out.reshape(N, C_out, H, W)


def _init_params(key, in_ch, out_ch):
    """Deterministic init mirroring nn.Conv2d default (uniform +/- 1/sqrt(fan_in))."""
    mid = in_ch // 2
    k1, k2, k3, k4 = jax.random.split(key, 4)
    bound1 = 1.0 / jnp.sqrt(in_ch)
    bound2 = 1.0 / jnp.sqrt(mid)
    w1 = jax.random.uniform(k1, (mid, in_ch), jnp.float32, -bound1, bound1)
    b1 = jax.random.uniform(k2, (mid,), jnp.float32, -bound1, bound1)
    w2 = jax.random.uniform(k3, (out_ch, mid), jnp.float32, -bound2, bound2)
    b2 = jax.random.uniform(k4, (out_ch,), jnp.float32, -bound2, bound2)
    return w1, b1, w2, b2


if __name__ == "__main__":
    key = jax.random.PRNGKey(0)
    kx, kp = jax.random.split(key)

    N, in_ch, H, W = 2, 4, 16, 16
    out_ch = 1
    sig = True

    x = jax.random.normal(kx, (N, in_ch, H, W), jnp.float32)
    w1, b1, w2, b2 = _init_params(kp, in_ch, out_ch)

    out = outconv2_pallas(x, w1, b1, w2, b2, sig=sig)
    out = jax.block_until_ready(out)

    # Unfused pure-JAX reference, op-for-op with the PyTorch module.
    h = jnp.einsum("nchw,mc->nmhw", x, w1) + b1[None, :, None, None]
    y = jnp.einsum("nmhw,om->nohw", h, w2) + b2[None, :, None, None]
    ref = jax.nn.sigmoid(y) if sig else jnp.tanh(y)

    assert out.shape == (N, out_ch, H, W)
    assert jnp.allclose(out, ref, atol=1e-5, rtol=1e-5)

    print("KERNEL_OK")
</pallas_src>

<mosaic_0001>
module attributes {stable_mosaic.version = 11 : i64} {
  func.func @_outconv2_kernel(%arg0: i32, %arg1: i32, %arg2: memref<1x4x2x128xf32, #tpu.memory_space<vmem>>, %arg3: memref<1x4xf32, #tpu.memory_space<smem>>, %arg4: memref<1xf32, #tpu.memory_space<smem>>, %arg5: memref<1x1x2x128xf32, #tpu.memory_space<vmem>>) attributes {dimension_semantics = [#tpu.dimension_semantics<parallel>, #tpu.dimension_semantics<parallel>], iteration_bounds = array<i64: 2, 1>, scalar_prefetch = 0 : i64, scratch_operands = 0 : i64, tpu.core_type = #tpu.core_type<tc>, window_params = [{transform_indices = @transform_0, window_bounds = array<i64: 1, 4, 2, 128>}, {transform_indices = @transform_1, window_bounds = array<i64: 1, 4>}, {transform_indices = @transform_2, window_bounds = array<i64: 1>}, {transform_indices = @transform_3, window_bounds = array<i64: 1, 1, 2, 128>}]} {
    %c0 = arith.constant 0 : index
    %c0_0 = arith.constant 0 : index
    %c0_1 = arith.constant 0 : index
    %c0_2 = arith.constant 0 : index
    %0 = vector.load %arg2[%c0, %c0_0, %c0_1, %c0_2] : memref<1x4x2x128xf32, #tpu.memory_space<vmem>>, vector<1x1x2x128xf32>
    %1 = vector.shape_cast %0 : vector<1x1x2x128xf32> to vector<2x128xf32>
    %c0_3 = arith.constant 0 : index
    %c1 = arith.constant 1 : index
    %c0_4 = arith.constant 0 : index
    %c0_5 = arith.constant 0 : index
    %2 = vector.load %arg2[%c0_3, %c1, %c0_4, %c0_5] : memref<1x4x2x128xf32, #tpu.memory_space<vmem>>, vector<1x1x2x128xf32>
    %3 = vector.shape_cast %2 : vector<1x1x2x128xf32> to vector<2x128xf32>
    %c0_6 = arith.constant 0 : index
    %c2 = arith.constant 2 : index
    %c0_7 = arith.constant 0 : index
    %c0_8 = arith.constant 0 : index
    %4 = vector.load %arg2[%c0_6, %c2, %c0_7, %c0_8] : memref<1x4x2x128xf32, #tpu.memory_space<vmem>>, vector<1x1x2x128xf32>
    %5 = vector.shape_cast %4 : vector<1x1x2x128xf32> to vector<2x128xf32>
    %c0_9 = arith.constant 0 : index
    %c3 = arith.constant 3 : index
    %c0_10 = arith.constant 0 : index
    %c0_11 = arith.constant 0 : index
    %6 = vector.load %arg2[%c0_9, %c3, %c0_10, %c0_11] : memref<1x4x2x128xf32, #tpu.memory_space<vmem>>, vector<1x1x2x128xf32>
    %7 = vector.shape_cast %6 : vector<1x1x2x128xf32> to vector<2x128xf32>
    %c0_12 = arith.constant 0 : index
    %c0_13 = arith.constant 0 : index
    %8 = memref.load %arg3[%c0_12, %c0_13] : memref<1x4xf32, #tpu.memory_space<smem>>
    %9 = vector.broadcast %8 : f32 to vector<2x128xf32>
    %10 = arith.mulf %1, %9 : vector<2x128xf32>
    %c0_14 = arith.constant 0 : index
    %c1_15 = arith.constant 1 : index
    %11 = memref.load %arg3[%c0_14, %c1_15] : memref<1x4xf32, #tpu.memory_space<smem>>
    %12 = vector.broadcast %11 : f32 to vector<2x128xf32>
    %13 = arith.mulf %3, %12 : vector<2x128xf32>
    %14 = arith.addf %10, %13 : vector<2x128xf32>
    %c0_16 = arith.constant 0 : index
    %c2_17 = arith.constant 2 : index
    %15 = memref.load %arg3[%c0_16, %c2_17] : memref<1x4xf32, #tpu.memory_space<smem>>
    %16 = vector.broadcast %15 : f32 to vector<2x128xf32>
    %17 = arith.mulf %5, %16 : vector<2x128xf32>
    %18 = arith.addf %14, %17 : vector<2x128xf32>
    %c0_18 = arith.constant 0 : index
    %c3_19 = arith.constant 3 : index
    %19 = memref.load %arg3[%c0_18, %c3_19] : memref<1x4xf32, #tpu.memory_space<smem>>
    %20 = vector.broadcast %19 : f32 to vector<2x128xf32>
    %21 = arith.mulf %7, %20 : vector<2x128xf32>
    %22 = arith.addf %18, %21 : vector<2x128xf32>
    %c0_20 = arith.constant 0 : index
    %23 = memref.load %arg4[%c0_20] : memref<1xf32, #tpu.memory_space<smem>>
    %24 = vector.broadcast %23 : f32 to vector<2x128xf32>
    %25 = arith.addf %22, %24 : vector<2x128xf32>
    %26 = arith.negf %25 : vector<2x128xf32>
    %27 = math.exp %26 : vector<2x128xf32>
    %cst = arith.constant 1.000000e+00 : f32
    %28 = vector.broadcast %cst : f32 to vector<2x128xf32>
    %29 = arith.addf %28, %27 : vector<2x128xf32>
    %30 = arith.divf %28, %29 : vector<2x128xf32>
    %c0_21 = arith.constant 0 : index
    %c0_22 = arith.constant 0 : index
    %c0_23 = arith.constant 0 : index
    %c0_24 = arith.constant 0 : index
    %31 = vector.load %arg5[%c0_21, %c0_22, %c0_23, %c0_24] : memref<1x1x2x128xf32, #tpu.memory_space<vmem>>, vector<1x1x2x128xf32>
    %32 = vector.shape_cast %31 : vector<1x1x2x128xf32> to vector<2x128xf32>
    %33 = vector.shape_cast %30 : vector<2x128xf32> to vector<1x1x2x128xf32>
    tpu.vector_store %arg5[%c0_21, %c0_22, %c0_23, %c0_24], %33 {strides = array<i32>} : memref<1x1x2x128xf32, #tpu.memory_space<vmem>>, vector<1x1x2x128xf32>,
    return
  }
  func.func @transform_0(%arg0: i32, %arg1: i32) -> (i32, i32, i32, i32) {
    %c0_i32 = arith.constant 0 : i32
    %c0_i32_0 = arith.constant 0 : i32
    %c0_i32_1 = arith.constant 0 : i32
    return %arg0, %c0_i32, %arg1, %c0_i32_0 : i32, i32, i32, i32
  }
  func.func @transform_1(%arg0: i32, %arg1: i32) -> (i32, i32) {
    %c0_i32 = arith.constant 0 : i32
    %c0_i32_0 = arith.constant 0 : i32
    %c0_i32_1 = arith.constant 0 : i32
    return %c0_i32, %c0_i32_0 : i32, i32
  }
  func.func @transform_2(%arg0: i32, %arg1: i32) -> i32 {
    %c0_i32 = arith.constant 0 : i32
    %c0_i32_0 = arith.constant 0 : i32
    return %c0_i32 : i32
  }
  func.func @transform_3(%arg0: i32, %arg1: i32) -> (i32, i32, i32, i32) {
    %c0_i32 = arith.constant 0 : i32
    %c0_i32_0 = arith.constant 0 : i32
    %c0_i32_1 = arith.constant 0 : i32
    return %arg0, %c0_i32, %arg1, %c0_i32_0 : i32, i32, i32, i32
  }
}

</mosaic_0001>

<llo_original>
// kernel: tpu_custom_call.1
$region0: #{tpu_custom_call.1}
  #allocation0 [shape = 'u32[]', space=smem, size = 0x4, offset = 0x4, fixed_abs, tag = 'smem constant byte address 0x4 - core index']
  #allocation1 [shape = 'u32[144,128]{1,0:T(1,128)}', space=vmem, size = 0x12000, scoped, tag = 'internal scratch']
  #allocation2 [shape = 'f32[1]{0:T(128)S(6)}', space=smem, size = 0x200, scoped, tag = 'scoped memory for tpu_custom_call.1']
  %s0 = inlined_call_operand.hbm [shape: f32[2,4,2,128], index: 0, kind: input, shape index: {}]
  %s1 = inlined_call_operand.vmem [shape: f32[1,4], index: 1, kind: input, shape index: {}]
  %s2 = inlined_call_operand.<no memory space> [shape: f32[1], index: 2, kind: input, shape index: {}]
  %s3 = inlined_call_operand.hbm [shape: f32[2,1,2,128], index: 3, kind: output, shape index: {}]
  %s4 = sld [smem:[#allocation0]]
  $region53: #{tpu_custom_call.1} parent=0
    _
  %s6 = ssub.s32 1, %s4
  %s7 = scalar_select 0, %s6, %s4
  %8 = sst [smem:[#allocation2]] %s2
  $region1: #{tpu_custom_call.1} parent=0
    #allocation3 [shape = 'u8[8192]{0}', space=vmem, size = 0x2000, scoped, tag = 'input window, operand 0']
    #allocation4 [shape = 's32[2]{0}', space=sflag, size = 0x8, scoped, tag = 'scoped memory for tpu_custom_call.1']
    #allocation5 [shape = 's32[2]{0}', space=sflag, size = 0x8, scoped, tag = 'scoped memory for tpu_custom_call.1']
    #allocation6 [shape = 's32[2]{0}', space=sflag, size = 0x8, scoped, tag = 'scoped memory for tpu_custom_call.1']
    #allocation7 [shape = 'u8[512]{0}', space=smem, size = 0x200, scoped, tag = 'input window, operand 1, single buffered']
    #allocation8 [shape = 'u8[2048]{0}', space=vmem, size = 0x800, scoped, tag = 'output window, operand 0']
    %9 = vsyncpa [#allocation4], 0
    %s10 = scalar_lea.sflag [#allocation4], 1
    %11 = vsyncpa %s10, 0
    %12 = vsyncpa [#allocation6], 0
    %13 = vsyncpa [#allocation5], 0
    %s14 = scalar_lea.sflag [#allocation5], 1
    %15 = vsyncpa %s14, 0
    loop: start=0, step=1, limit=4
    $region2: #{tpu_custom_call.1} parent=1 // loop_pre_header
      _
    $region3: #{tpu_custom_call.1} parent=1 // loop_header
      %s17 = sphi 0, %s21
      %p18 = scmp.ge.s32.totalorder %s17, 4
      %s24 = sphi 0, %s36
      %s25 = sphi 0, %s32
      %s26 = sphi 0, %s24
      %s27 = sphi 0, %s25
      %s28 = sphi 0, %s26
      %s29 = sphi 0, %s27
      %s41 = sphi 0, %s43
      %s44 = sphi 0, %s41
      %s45 = sphi 0, %s44
      %s61 = sphi 0, %s45
      %s65 = sphi 0, %s65
      %s67 = sphi 0, %s65
      %s68 = sphi 0, %s67
      %s82 = sphi 0, %s68
      %s86 = sphi 0, %s86
      %s88 = sphi 0, %s86
      %s89 = sphi 0, %s88
      %s103 = sphi 0, %s89
      %s111 = sphi 0, %s113
      %s114 = sphi 0, %s111
      %s115 = sphi 0, %s114
      %s131 = sphi 0, %s115
    $region4: #{tpu_custom_call.1} parent=1 // loop_header_branch
      %20 = sbr.rel (%p18) target = $region8
    $region5: #{tpu_custom_call.1} parent=1 // loop_body
      %s22 = ssub.s32 %s17, 1
      %s23 = ssub.s32 %s17, 2
      %s30 = sadd.s32 1, %s25
      %p31 = scmp.ge.s32.totalorder %s30, 1
      %s32 = scalar_select %p31, 0, %s30
      %s33 = sadd.s32 1, %s24
      %s34 = scalar_select %p31, %s33, %s24
      %p35 = scmp.ge.s32.totalorder %s34, 2
      %s36 = scalar_select %p35, 0, %s34
      %s37 = ssub.s32 %s24, %s36
      %s38 = ssub.s32 %s25, %s32
      %s39 = sor.u32 %s37, %s38
      %p40 = scmp.eq.s32.totalorder %s39, 0
      %s42 = sadd.s32 %s41, 1
      %s43 = scalar_select %p40, %s41, %s42
      %p46 = pneg %p40
      %p47 = scmp.eq.s32.totalorder %s17, 1
      %p48 = por %p46, %p47
      %p49 = scmp.ne.s32.totalorder %s41, %s44
      %p50 = scmp.eq.s32.totalorder %s17, 0
      %p51 = por %p49, %p50
      %p52 = scmp.ne.s32.totalorder %s41, %s44
      %p53 = scmp.eq.s32.totalorder %s22, 1
      %p54 = por %p52, %p53
      %p55 = scmp.ne.s32.totalorder %s44, %s45
      %p56 = scmp.eq.s32.totalorder %s22, 0
      %p57 = por %p55, %p56
      %p58 = scmp.ne.s32.totalorder %s44, %s45
      %p59 = scmp.eq.s32.totalorder %s23, 1
      %p60 = por %p58, %p59
      %p62 = scmp.ne.s32.totalorder %s45, %s61
      %p63 = scmp.eq.s32.totalorder %s23, 0
      %p64 = por %p62, %p63
      %s66 = sadd.s32 %s65, 1
      %p69 = scmp.eq.s32.totalorder %s17, 1
      %p70 = scmp.ne.s32.totalorder %s65, %s67
      %p71 = scmp.eq.s32.totalorder %s17, 0
      %p72 = por %p70, %p71
      %p73 = scmp.ne.s32.totalorder %s65, %s67
      %p74 = scmp.eq.s32.totalorder %s22, 1
      %p75 = por %p73, %p74
      %p76 = scmp.ne.s32.totalorder %s67, %s68
      %p77 = scmp.eq.s32.totalorder %s22, 0
      %p78 = por %p76, %p77
      %p79 = scmp.ne.s32.totalorder %s67, %s68
      %p80 = scmp.eq.s32.totalorder %s23, 1
      %p81 = por %p79, %p80
      %p83 = scmp.ne.s32.totalorder %s68, %s82
      %p84 = scmp.eq.s32.totalorder %s23, 0
      %p85 = por %p83, %p84
      %s87 = sadd.s32 %s86, 1
      %p90 = scmp.eq.s32.totalorder %s17, 1
      %p91 = scmp.ne.s32.totalorder %s86, %s88
      %p92 = scmp.eq.s32.totalorder %s17, 0
      %p93 = por %p91, %p92
      %p94 = scmp.ne.s32.totalorder %s86, %s88
      %p95 = scmp.eq.s32.totalorder %s22, 1
      %p96 = por %p94, %p95
      %p97 = scmp.ne.s32.totalorder %s88, %s89
      %p98 = scmp.eq.s32.totalorder %s22, 0
      %p99 = por %p97, %p98
      %p100 = scmp.ne.s32.totalorder %s88, %s89
      %p101 = scmp.eq.s32.totalorder %s23, 1
      %p102 = por %p100, %p101
      %p104 = scmp.ne.s32.totalorder %s89, %s103
      %p105 = scmp.eq.s32.totalorder %s23, 0
      %p106 = por %p104, %p105
      %s107 = ssub.s32 %s24, %s36
      %s108 = ssub.s32 %s25, %s32
      %s109 = sor.u32 %s107, %s108
      %p110 = scmp.eq.s32.totalorder %s109, 0
      %s112 = sadd.s32 %s111, 1
      %s113 = scalar_select %p110, %s111, %s112
      %p116 = pneg %p110
      %p117 = scmp.eq.s32.totalorder %s17, 1
      %p118 = por %p116, %p117
      %p119 = scmp.ne.s32.totalorder %s111, %s114
      %p120 = scmp.eq.s32.totalorder %s17, 0
      %p121 = por %p119, %p120
      %p122 = scmp.ne.s32.totalorder %s111, %s114
      %p123 = scmp.eq.s32.totalorder %s22, 1
      %p124 = por %p122, %p123
      %p125 = scmp.ne.s32.totalorder %s114, %s115
      %p126 = scmp.eq.s32.totalorder %s22, 0
      %p127 = por %p125, %p126
      %p128 = scmp.ne.s32.totalorder %s114, %s115
      %p129 = scmp.eq.s32.totalorder %s23, 1
      %p130 = por %p128, %p129
      %p132 = scmp.ne.s32.totalorder %s115, %s131
      %p133 = scmp.eq.s32.totalorder %s23, 0
      %p134 = por %p132, %p133
      %p135 = scmp.le.s32.totalorder 1, %s17
      %p136 = scmp.lt.s32.totalorder %s17, 3
      %p137 = pnand %p135, %p136
      %p138 = pneg %p137
      // Predicated region
      $region9: #{tpu_custom_call.1} parent=5 // pred_check
        _
      $region10: #{tpu_custom_call.1} parent=5 // pred_check_branch
        %140 = sbr.rel (%p137) target = $region12
      $region11: #{tpu_custom_call.1} parent=5 // pred_region
        %s141 = ssub.s32 %s17, 1
        // Predicated region
        $region13: #{tpu_custom_call.1} parent=11 // pred_check
          %p142 = pneg %p78
        $region14: #{tpu_custom_call.1} parent=11 // pred_check_branch
          %144 = sbr.rel (%p142) target = $region16
        $region15: #{tpu_custom_call.1} parent=11 // pred_region
          %s146 = ssub.s32 16, 16
          %147 = vsyncadd [#allocation6], %s146
          %s149 = sshll.u32 %s1, 4
          %s150 = int_to_ptr.vmem [resolvable:$true] %s149
          %152 = dma.vmem_to_smem %s150, 16, [#allocation7], [#allocation6]
        $region16: #{tpu_custom_call.1} parent=11 // pred_fallthru
          _
        // Predicated region
        $region17: #{tpu_custom_call.1} parent=11 // pred_check
          %p153 = pneg %p99
        $region18: #{tpu_custom_call.1} parent=11 // pred_check_branch
          %155 = sbr.rel (%p153) target = $region20
        $region19: #{tpu_custom_call.1} parent=11 // pred_region
          _
        $region20: #{tpu_custom_call.1} parent=11 // pred_fallthru
          _
      $region12: #{tpu_custom_call.1} parent=5 // pred_fallthru
        _
      %p156 = scmp.lt.s32.totalorder %s17, 2
      // Predicated region
      $region21: #{tpu_custom_call.1} parent=5 // pred_check
        %p157 = pneg %p156
      $region22: #{tpu_custom_call.1} parent=5 // pred_check_branch
        %159 = sbr.rel (%p157) target = $region24
      $region23: #{tpu_custom_call.1} parent=5 // pred_region
        // Predicated region
        $region25: #{tpu_custom_call.1} parent=23 // pred_check
          %p160 = pneg %p51
        $region26: #{tpu_custom_call.1} parent=23 // pred_check_branch
          %162 = sbr.rel (%p160) target = $region28
        $region27: #{tpu_custom_call.1} parent=23 // pred_region
          %s163 = sand.u32 %s41, 1
          %s164 = scalar_lea.sflag [#allocation4], %s163
          %s165 = sand.u32 %s41, 1
          %s166 = smul.addr %s165, 8
          %s167 = scalar_lea.vmem [#allocation3], %s166
          %s169 = ssub.s32 128, 128
          %170 = vsyncadd %s164, %s169
          %s171 = smul.addr %s24, 4
          %s172 = sadd.s32 %s25, %s171
          %s173 = smul.addr %s172, 32
          %s174 = scalar_lea.hbm %s0, %s173
          %s175 = sshll.u32 %s167, 4
          %s176 = int_to_ptr.vmem [resolvable:$true] %s175
          %181 = dma.hbm_to_vmem [thread:$0]  %s174, 128, %s176, %s164, 32, 32, 2
        $region28: #{tpu_custom_call.1} parent=23 // pred_fallthru
          _
      $region24: #{tpu_custom_call.1} parent=5 // pred_fallthru
        _
      %p182 = scmp.le.s32.totalorder 1, %s17
      %p183 = scmp.lt.s32.totalorder %s17, 3
      %p184 = pnand %p182, %p183
      %p185 = pneg %p184
      // Predicated region
      $region29: #{tpu_custom_call.1} parent=5 // pred_check
        _
      $region30: #{tpu_custom_call.1} parent=5 // pred_check_branch
        %187 = sbr.rel (%p184) target = $region32
      $region31: #{tpu_custom_call.1} parent=5 // pred_region
        %s188 = ssub.s32 %s17, 1
        %s189 = sand.u32 %s44, 1
        %s190 = scalar_lea.sflag [#allocation4], %s189
        %s191 = sand.u32 %s44, 1
        %s192 = smul.addr %s191, 8
        %s193 = scalar_lea.vmem [#allocation3], %s192
        // Predicated region
        $region33: #{tpu_custom_call.1} parent=31 // pred_check
          %p194 = pneg %p57
        $region34: #{tpu_custom_call.1} parent=31 // pred_check_branch
          %196 = sbr.rel (%p194) target = $region36
        $region35: #{tpu_custom_call.1} parent=31 // pred_region
          %197 = dma.done %s190, 128
        $region36: #{tpu_custom_call.1} parent=31 // pred_fallthru
          _
        // Predicated region
        $region37: #{tpu_custom_call.1} parent=31 // pred_check
          %p198 = pneg %p78
        $region38: #{tpu_custom_call.1} parent=31 // pred_check_branch
          %200 = sbr.rel (%p198) target = $region40
        $region39: #{tpu_custom_call.1} parent=31 // pred_region
          %201 = dma.done [#allocation6], 16
        $region40: #{tpu_custom_call.1} parent=31 // pred_fallthru
          _
        %202 = sfence
        %s203 = sand.u32 %s44, 1
        %s204 = scalar_lea.sflag [#allocation4], %s203
        %s205 = sand.u32 %s44, 1
        %s206 = smul.addr %s205, 8
        %s207 = scalar_lea.vmem [#allocation3], %s206
        %p208 = pneg %p57
        %p209 = pneg %p54
        %p210 = pneg %p78
        %p211 = pneg %p75
        %p212 = pneg %p99
        %p213 = pneg %p96
        %p214 = pneg %p127
        %p215 = pneg %p124
        %s216 = sand.u32 %s114, 1
        %s217 = scalar_lea.sflag [#allocation5], %s216
        %s218 = sand.u32 %s114, 1
        %s219 = smul.addr %s218, 2
        %s220 = scalar_lea.vmem [#allocation8], %s219
        %v221 = vld [vmem:[%s193] sm:$0x3]
        %s222 = scalar_lea.vmem %s193, 2 [#allocation3]
        %v223 = vld [vmem:[%s222] sm:$0x3]
        %s224 = scalar_lea.vmem %s193, 4 [#allocation3]
        %v225 = vld [vmem:[%s224] sm:$0x3]
        %s226 = scalar_lea.vmem %s193, 6 [#allocation3]
        %v227 = vld [vmem:[%s226] sm:$0x3]
        %s228 = sld [smem:[#allocation7]]
        %v229 = vstv %s228
        %v230 = vmul.f32 %v221, %v229
        %s231 = sld [smem:[#allocation7 + $0x1]]
        %v232 = vstv %s231
        %v233 = vmul.f32 %v223, %v232
        %v234 = vadd.f32 %v230, %v233
        %s235 = sld [smem:[#allocation7 + $0x2]]
        %v236 = vstv %s235
        %v237 = vmul.f32 %v225, %v236
        %v238 = vadd.f32 %v234, %v237
        %s239 = sld [smem:[#allocation7 + $0x3]]
        %v240 = vstv %s239
        %v241 = vmul.f32 %v227, %v240
        %v242 = vadd.f32 %v238, %v241
        %s243 = sld [smem:[#allocation2]]
        %v244 = vstv %s243
        %v245 = vadd.f32 %v242, %v244
        %v246 = vxor.u32 %v245, 2147483648
        %v247 = vmul.f32 %v246, 1.442695
        %v248 = vpow.pop %v247
        %v249 = vadd.f32 %v248, 1.0
        %v250 = vrcp.pop %v249
        %v251 = vmul.f32 1.0, %v250
        %252 = vst [vmem:[%s220] sm:$0x3] %v251
        %s253 = sand.u32 %s114, 1
        %s254 = scalar_lea.sflag [#allocation5], %s253
        %s255 = sand.u32 %s114, 1
        %s256 = smul.addr %s255, 2
        %s257 = scalar_lea.vmem [#allocation8], %s256
        // Predicated region
        $region41: #{tpu_custom_call.1} parent=31 // pred_check
          %p258 = pneg %p124
        $region42: #{tpu_custom_call.1} parent=31 // pred_check_branch
          %260 = sbr.rel (%p258) target = $region44
        $region43: #{tpu_custom_call.1} parent=31 // pred_region
          %s262 = ssub.s32 32, 32
          %263 = vsyncadd %s254, %s262
          %s264 = sadd.s32 %s27, %s26
          %s265 = smul.addr %s264, 32
          %s266 = scalar_lea.hbm %s3, %s265
          %s268 = sshll.u32 %s257, 4
          %s269 = int_to_ptr.vmem [resolvable:$true] %s268
          %271 = dma.vmem_to_hbm [thread:$0]  %s269, 32, %s266, %s254
        $region44: #{tpu_custom_call.1} parent=31 // pred_fallthru
          _
      $region32: #{tpu_custom_call.1} parent=5 // pred_fallthru
        _
      %p272 = scmp.le.s32.totalorder 2, %s17
      // Predicated region
      $region45: #{tpu_custom_call.1} parent=5 // pred_check
        %p273 = pneg %p272
      $region46: #{tpu_custom_call.1} parent=5 // pred_check_branch
        %275 = sbr.rel (%p273) target = $region48
      $region47: #{tpu_custom_call.1} parent=5 // pred_region
        %s276 = ssub.s32 %s17, 2
        // Predicated region
        $region49: #{tpu_custom_call.1} parent=47 // pred_check
          %p277 = pneg %p130
        $region50: #{tpu_custom_call.1} parent=47 // pred_check_branch
          %279 = sbr.rel (%p277) target = $region52
        $region51: #{tpu_custom_call.1} parent=47 // pred_region
          %s280 = sand.u32 %s115, 1
          %s281 = scalar_lea.sflag [#allocation5], %s280
          %s282 = sand.u32 %s115, 1
          %s283 = smul.addr %s282, 2
          %s284 = scalar_lea.vmem [#allocation8], %s283
          %285 = dma.done %s281, 32
        $region52: #{tpu_custom_call.1} parent=47 // pred_fallthru
          _
      $region48: #{tpu_custom_call.1} parent=5 // pred_fallthru
        _
    $region6: #{tpu_custom_call.1} parent=1 // loop_footer
      %s21 = sadd.s32 1, %s17
    $region7: #{tpu_custom_call.1} parent=1 // loop_footer_branch
      %16 = sbr.rel target = $region3
    $region8: #{tpu_custom_call.1} parent=1 // loop_exit
      _
    %286 = vsyncpa [#allocation4], 1
    %s287 = scalar_lea.sflag [#allocation4], 1
    %288 = vsyncpa %s287, 1
    %289 = vsyncpa [#allocation5], 1
    %s290 = scalar_lea.sflag [#allocation5], 1
    %291 = vsyncpa %s290, 1
    %292 = vsyncpa [#allocation6], 1
    %s293 = scalar_lea.sflag [#allocation6], 1
    %294 = vsyncpa %s293, 1

</llo_original>
